<compile_context>
chip_gen: v7x
topology: tpu7x:2x2x1
jax: 0.10.0
libtpu: 0.0.40
codegen_flags: <defaults>
</compile_context>

<pallas_src>
import jax
import jax.numpy as jnp
from jax.experimental import pallas as pl
from jax.experimental.pallas import tpu as pltpu

IN_DIM = 28 * 28        # 784 (full-dim K block; no padding)
HIDDEN = 128
OUT_DIM = 10
N_PAD = 128             # lane-dense output slab
TB_MAX = 512            # max batch tile (multiple of 8 sublanes)


def mlp_kernel(x_ref, w1_ref, b1_ref, w2_ref, b2_ref, o_ref):
    # x: (TB, 784), w1: (784, 128), b1: (1, 128), w2: (128, 128), b2: (1, 128)
    h = jnp.dot(x_ref[...], w1_ref[...], preferred_element_type=jnp.float32)
    h = jnp.maximum(h + b1_ref[...], 0.0)                       # bias + ReLU (f32)
    y = jnp.dot(h, w2_ref[...], preferred_element_type=jnp.float32)
    o_ref[...] = (y + b2_ref[...]).astype(o_ref.dtype)          # lane-dense (TB,128) store


def _choose_tb(B: int) -> int:
    """Batch tile: multiple of 8 (or the full batch), capped at TB_MAX, and
    >= 2 grid tiles whenever the batch allows it (v7x has 2 TensorCores)."""
    if B <= 16:
        return B                      # single full-array block, no ragged tile
    half = (B + 1) // 2               # aim for at least 2 tiles
    half = ((half + 7) // 8) * 8      # round up to sublane multiple
    return min(TB_MAX, half)


def prepare_params(w1, b1, w2, b2):
    """One-time (cacheable) weight prep: lane-pad the second linear to 128.
    Zero padding is exact — padded columns produce zero logits that are sliced off."""
    w2_p = jnp.zeros((HIDDEN, N_PAD), jnp.float32).at[:, :OUT_DIM].set(w2)
    b2_p = jnp.zeros((1, N_PAD), jnp.float32).at[:, :OUT_DIM].set(b2)
    return (w1.astype(jnp.float32), b1.astype(jnp.float32), w2_p, b2_p)


def simple_nn_forward(x_nchw, w1, b1, w2_p, b2_p):
    """x_nchw: (B, 1, 28, 28) float32.  Params from prepare_params().
    Returns logits (B, 10) float32."""
    B = x_nchw.shape[0]
    x_flat = x_nchw.reshape(B, IN_DIM)          # == torch.nn.Flatten on NCHW

    tb = _choose_tb(B)
    grid = (pl.cdiv(B, tb),)

    out_pad = pl.pallas_call(
        mlp_kernel,
        out_shape=jax.ShapeDtypeStruct((B, N_PAD), jnp.float32),
        grid=grid,
        in_specs=[
            pl.BlockSpec((tb, IN_DIM), lambda i: (i, 0)),       # activation tile (pipelined)
            pl.BlockSpec((IN_DIM, HIDDEN), lambda i: (0, 0)),   # weights: constant index,
            pl.BlockSpec((1, HIDDEN), lambda i: (0, 0)),        #   DMA'd once, VMEM-resident
            pl.BlockSpec((HIDDEN, N_PAD), lambda i: (0, 0)),
            pl.BlockSpec((1, N_PAD), lambda i: (0, 0)),
        ],
        out_specs=pl.BlockSpec((tb, N_PAD), lambda i: (i, 0)),
        compiler_params=pltpu.CompilerParams(
            dimension_semantics=("parallel",),                  # batch tiles independent
        ),
    )(x_flat, w1, b1, w2_p, b2_p)

    return out_pad[:, :OUT_DIM]


def init_params(key):
    """Deterministic init mimicking nn.Linear shapes.

    PyTorch Linear stores weight as (out, in) and computes x @ W.T + b; we store
    the transposed weight (in, out) so the kernel does x @ W + b."""
    k1, k2, k3, k4 = jax.random.split(key, 4)
    s1 = 1.0 / jnp.sqrt(IN_DIM)
    s2 = 1.0 / jnp.sqrt(HIDDEN)
    w1 = jax.random.uniform(k1, (IN_DIM, HIDDEN), jnp.float32, -s1, s1)
    b1 = jax.random.uniform(k2, (1, HIDDEN), jnp.float32, -s1, s1)
    w2 = jax.random.uniform(k3, (HIDDEN, OUT_DIM), jnp.float32, -s2, s2)
    b2 = jax.random.uniform(k4, (1, OUT_DIM), jnp.float32, -s2, s2)
    return w1, b1, w2, b2


if __name__ == "__main__":
    key = jax.random.PRNGKey(0)
    kx, kp, kx2 = jax.random.split(key, 3)

    w1, b1, w2, b2 = init_params(kp)
    params = prepare_params(w1, b1, w2, b2)     # pad/cast once, reuse every call
    fwd = jax.jit(simple_nn_forward)

    def ref_fn(x):
        xf = x.reshape(x.shape[0], -1)
        return jnp.maximum(xf @ w1 + b1, 0.0) @ w2 + b2

    # Small batch (single full-array tile, no ragged block).
    B = 2
    x = jax.random.normal(kx, (B, 1, 28, 28), jnp.float32)
    out = jax.block_until_ready(fwd(x, *params))
    assert out.shape == (B, OUT_DIM)
    assert jnp.allclose(out, ref_fn(x), atol=1e-5, rtol=1e-5)

    # Ragged multi-tile batch (exercises the masked partial last block path).
    B2 = 37
    x2 = jax.random.normal(kx2, (B2, 1, 28, 28), jnp.float32)
    out2 = jax.block_until_ready(fwd(x2, *params))
    assert out2.shape == (B2, OUT_DIM)
    assert jnp.allclose(out2, ref_fn(x2), atol=1e-5, rtol=1e-5)

    print("KERNEL_OK")
</pallas_src>

<mosaic_0001>
module attributes {stable_mosaic.version = 11 : i64} {
  func.func @mlp_kernel(%arg0: i32, %arg1: memref<2x784xf32, #tpu.memory_space<vmem>>, %arg2: memref<784x128xf32, #tpu.memory_space<vmem>>, %arg3: memref<1x128xf32, #tpu.memory_space<vmem>>, %arg4: memref<128x128xf32, #tpu.memory_space<vmem>>, %arg5: memref<1x128xf32, #tpu.memory_space<vmem>>, %arg6: memref<2x128xf32, #tpu.memory_space<vmem>>) attributes {dimension_semantics = [#tpu.dimension_semantics<parallel>], iteration_bounds = array<i64: 1>, scalar_prefetch = 0 : i64, scratch_operands = 0 : i64, tpu.core_type = #tpu.core_type<tc>, window_params = [{transform_indices = @transform_0, window_bounds = array<i64: 2, 784>}, {pipeline_mode = #tpu.pipeline_mode<synchronous>, transform_indices = @transform_1, window_bounds = array<i64: 784, 128>}, {pipeline_mode = #tpu.pipeline_mode<synchronous>, transform_indices = @transform_2, window_bounds = array<i64: 1, 128>}, {pipeline_mode = #tpu.pipeline_mode<synchronous>, transform_indices = @transform_3, window_bounds = array<i64: 128, 128>}, {pipeline_mode = #tpu.pipeline_mode<synchronous>, transform_indices = @transform_4, window_bounds = array<i64: 1, 128>}, {transform_indices = @transform_5, window_bounds = array<i64: 2, 128>}]} {
    %c0 = arith.constant 0 : index
    %c0_0 = arith.constant 0 : index
    %0 = vector.load %arg1[%c0, %c0_0] : memref<2x784xf32, #tpu.memory_space<vmem>>, vector<2x784xf32>
    %c0_1 = arith.constant 0 : index
    %c0_2 = arith.constant 0 : index
    %1 = vector.load %arg2[%c0_1, %c0_2] : memref<784x128xf32, #tpu.memory_space<vmem>>, vector<784x128xf32>
    %cst = arith.constant dense<0.000000e+00> : vector<2x128xf32>
    %2 = tpu.matmul %0, %1, %cst {dimension_numbers = #tpu.dot_dimension_numbers<[1], [0], [0], [1], [0, 0, 1, 1], [], []>} : vector<2x784xf32>, vector<784x128xf32>, vector<2x128xf32> -> vector<2x128xf32>
    %c0_3 = arith.constant 0 : index
    %c0_4 = arith.constant 0 : index
    %3 = vector.load %arg3[%c0_3, %c0_4] : memref<1x128xf32, #tpu.memory_space<vmem>>, vector<1x128xf32>
    %4 = vector.broadcast %3 : vector<1x128xf32> to vector<2x128xf32>
    %5 = arith.addf %2, %4 : vector<2x128xf32>
    %cst_5 = arith.constant 0.000000e+00 : f32
    %6 = vector.broadcast %cst_5 : f32 to vector<2x128xf32>
    %7 = arith.maximumf %5, %6 : vector<2x128xf32>
    %c0_6 = arith.constant 0 : index
    %c0_7 = arith.constant 0 : index
    %8 = vector.load %arg4[%c0_6, %c0_7] : memref<128x128xf32, #tpu.memory_space<vmem>>, vector<128x128xf32>
    %cst_8 = arith.constant dense<0.000000e+00> : vector<2x128xf32>
    %9 = tpu.matmul %7, %8, %cst_8 {dimension_numbers = #tpu.dot_dimension_numbers<[1], [0], [0], [1], [0, 0, 1, 1], [], []>} : vector<2x128xf32>, vector<128x128xf32>, vector<2x128xf32> -> vector<2x128xf32>
    %c0_9 = arith.constant 0 : index
    %c0_10 = arith.constant 0 : index
    %10 = vector.load %arg5[%c0_9, %c0_10] : memref<1x128xf32, #tpu.memory_space<vmem>>, vector<1x128xf32>
    %11 = vector.broadcast %10 : vector<1x128xf32> to vector<2x128xf32>
    %12 = arith.addf %9, %11 : vector<2x128xf32>
    %c0_11 = arith.constant 0 : index
    %c0_12 = arith.constant 0 : index
    %13 = vector.load %arg6[%c0_11, %c0_12] : memref<2x128xf32, #tpu.memory_space<vmem>>, vector<2x128xf32>
    tpu.vector_store %arg6[%c0_11, %c0_12], %12 {strides = array<i32>} : memref<2x128xf32, #tpu.memory_space<vmem>>, vector<2x128xf32>,
    return
  }
  func.func @transform_0(%arg0: i32) -> (i32, i32) {
    %c0_i32 = arith.constant 0 : i32
    %c0_i32_0 = arith.constant 0 : i32
    return %arg0, %c0_i32 : i32, i32
  }
  func.func @transform_1(%arg0: i32) -> (i32, i32) {
    %c0_i32 = arith.constant 0 : i32
    %c0_i32_0 = arith.constant 0 : i32
    %c0_i32_1 = arith.constant 0 : i32
    return %c0_i32, %c0_i32_0 : i32, i32
  }
  func.func @transform_2(%arg0: i32) -> (i32, i32) {
    %c0_i32 = arith.constant 0 : i32
    %c0_i32_0 = arith.constant 0 : i32
    %c0_i32_1 = arith.constant 0 : i32
    return %c0_i32, %c0_i32_0 : i32, i32
  }
  func.func @transform_3(%arg0: i32) -> (i32, i32) {
    %c0_i32 = arith.constant 0 : i32
    %c0_i32_0 = arith.constant 0 : i32
    %c0_i32_1 = arith.constant 0 : i32
    return %c0_i32, %c0_i32_0 : i32, i32
  }
  func.func @transform_4(%arg0: i32) -> (i32, i32) {
    %c0_i32 = arith.constant 0 : i32
    %c0_i32_0 = arith.constant 0 : i32
    %c0_i32_1 = arith.constant 0 : i32
    return %c0_i32, %c0_i32_0 : i32, i32
  }
  func.func @transform_5(%arg0: i32) -> (i32, i32) {
    %c0_i32 = arith.constant 0 : i32
    %c0_i32_0 = arith.constant 0 : i32
    return %arg0, %c0_i32 : i32, i32
  }
}

</mosaic_0001>

<llo_original>
// kernel: simple_nn_forward.1
$region0: #{simple_nn_forward.1}
  #allocation0 [shape = 'u32[]', space=smem, size = 0x4, offset = 0x4, fixed_abs, tag = 'smem constant byte address 0x4 - core index']
  #allocation1 [shape = 'u32[144,128]{1,0:T(1,128)}', space=vmem, size = 0x12000, scoped, tag = 'internal scratch']
  %s0 = inlined_call_operand.vmem [shape: f32[2,784], index: 0, kind: input, shape index: {}]
  %s1 = inlined_call_operand.hbm [shape: f32[784,128], index: 1, kind: input, shape index: {}]
  %s2 = inlined_call_operand.vmem [shape: f32[1,128], index: 2, kind: input, shape index: {}]
  %s3 = inlined_call_operand.vmem [shape: f32[128,128], index: 3, kind: input, shape index: {}]
  %s4 = inlined_call_operand.vmem [shape: f32[1,128], index: 4, kind: input, shape index: {}]
  %s5 = inlined_call_operand.hbm [shape: f32[2,128], index: 5, kind: output, shape index: {}]
  %s6 = sld [smem:[#allocation0]]
  $region34: #{simple_nn_forward.1} parent=0
    _
  %s8 = ssub.s32 1, %s6
  %s9 = scalar_select 0, %s8, %s6
  $region1: #{simple_nn_forward.1} parent=0
    #allocation2 [shape = 'u8[401408]{0}', space=vmem, size = 0x62000, scoped, tag = 'input window, operand 1, single buffered']
    #allocation3 [shape = 's32[1]{0}', space=sflag, size = 0x4, scoped, tag = 'scoped memory for simple_nn_forward.1']
    #allocation4 [shape = 's32[1]{0}', space=sflag, size = 0x4, scoped, tag = 'scoped memory for simple_nn_forward.1']
    #allocation5 [shape = 'u8[1024]{0}', space=vmem, size = 0x400, scoped, tag = 'output window, operand 0, single buffered']
    %10 = vsyncpa [#allocation3], 0
    %11 = vsyncpa [#allocation4], 0
    // Predicated region
    $region2: #{simple_nn_forward.1} parent=1 // pred_check
      _
    $region3: #{simple_nn_forward.1} parent=1 // pred_check_branch
      %13 = sbr.rel (0) target = $region5
    $region4: #{simple_nn_forward.1} parent=1 // pred_region
      _
    $region5: #{simple_nn_forward.1} parent=1 // pred_fallthru
      _
    // Predicated region
    $region6: #{simple_nn_forward.1} parent=1 // pred_check
      _
    $region7: #{simple_nn_forward.1} parent=1 // pred_check_branch
      %15 = sbr.rel (0) target = $region9
    $region8: #{simple_nn_forward.1} parent=1 // pred_region
      %s17 = ssub.s32 12544, 12544
      %18 = vsyncadd [#allocation3], %s17
      %s19 = sshll.u32 [#allocation2], 4
      %s20 = int_to_ptr.vmem [resolvable:$true] %s19
      %25 = dma.hbm_to_vmem [thread:$0]  %s1, 12544, %s20, [#allocation3], 128, 128, 8
    $region9: #{simple_nn_forward.1} parent=1 // pred_fallthru
      _
    // Predicated region
    $region10: #{simple_nn_forward.1} parent=1 // pred_check
      _
    $region11: #{simple_nn_forward.1} parent=1 // pred_check_branch
      %27 = sbr.rel (0) target = $region13
    $region12: #{simple_nn_forward.1} parent=1 // pred_region
      _
    $region13: #{simple_nn_forward.1} parent=1 // pred_fallthru
      _
    // Predicated region
    $region14: #{simple_nn_forward.1} parent=1 // pred_check
      _
    $region15: #{simple_nn_forward.1} parent=1 // pred_check_branch
      %29 = sbr.rel (0) target = $region17
    $region16: #{simple_nn_forward.1} parent=1 // pred_region
      _
    $region17: #{simple_nn_forward.1} parent=1 // pred_fallthru
      _
    // Predicated region
    $region18: #{simple_nn_forward.1} parent=1 // pred_check
      _
    $region19: #{simple_nn_forward.1} parent=1 // pred_check_branch
      %31 = sbr.rel (0) target = $region21
    $region20: #{simple_nn_forward.1} parent=1 // pred_region
      _
    $region21: #{simple_nn_forward.1} parent=1 // pred_fallthru
      _
    // Predicated region
    $region22: #{simple_nn_forward.1} parent=1 // pred_check
      _
    $region23: #{simple_nn_forward.1} parent=1 // pred_check_branch
      %33 = sbr.rel (0) target = $region25
    $region24: #{simple_nn_forward.1} parent=1 // pred_region
      %34 = dma.done [#allocation3], 12544
    $region25: #{simple_nn_forward.1} parent=1 // pred_fallthru
      _
    %v35 = vld [vmem:[%s0] sm:$0xff]
    %v36 = vld [vmem:[%s0 + $0x8] sm:$0x3f]
    %v37 = vld [vmem:[#allocation2] sm:$0xff]
    %v38 = vld [vmem:[#allocation2 + $0x8] sm:$0xff]
    %v39 = vld [vmem:[#allocation2 + $0x10] sm:$0xff]
    %v40 = vld [vmem:[#allocation2 + $0x18] sm:$0xff]
    %v41 = vld [vmem:[#allocation2 + $0x20] sm:$0xff]
    %v42 = vld [vmem:[#allocation2 + $0x28] sm:$0xff]
    %v43 = vld [vmem:[#allocation2 + $0x30] sm:$0xff]
    %v44 = vld [vmem:[#allocation2 + $0x38] sm:$0xff]
    %v45 = vld [vmem:[#allocation2 + $0x40] sm:$0xff]
    %v46 = vld [vmem:[#allocation2 + $0x48] sm:$0xff]
    %v47 = vld [vmem:[#allocation2 + $0x50] sm:$0xff]
    %v48 = vld [vmem:[#allocation2 + $0x58] sm:$0xff]
    %v49 = vld [vmem:[#allocation2 + $0x60] sm:$0xff]
    %v50 = vld [vmem:[#allocation2 + $0x68] sm:$0xff]
    %v51 = vld [vmem:[#allocation2 + $0x70] sm:$0xff]
    %v52 = vld [vmem:[#allocation2 + $0x78] sm:$0xff]
    %v53 = vld [vmem:[#allocation2 + $0x80] sm:$0xff]
    %v54 = vld [vmem:[#allocation2 + $0x88] sm:$0xff]
    %v55 = vld [vmem:[#allocation2 + $0x90] sm:$0xff]
    %v56 = vld [vmem:[#allocation2 + $0x98] sm:$0xff]
    %v57 = vld [vmem:[#allocation2 + $0xa0] sm:$0xff]
    %v58 = vld [vmem:[#allocation2 + $0xa8] sm:$0xff]
    %v59 = vld [vmem:[#allocation2 + $0xb0] sm:$0xff]
    %v60 = vld [vmem:[#allocation2 + $0xb8] sm:$0xff]
    %v61 = vld [vmem:[#allocation2 + $0xc0] sm:$0xff]
    %v62 = vld [vmem:[#allocation2 + $0xc8] sm:$0xff]
    %v63 = vld [vmem:[#allocation2 + $0xd0] sm:$0xff]
    %v64 = vld [vmem:[#allocation2 + $0xd8] sm:$0xff]
    %v65 = vld [vmem:[#allocation2 + $0xe0] sm:$0xff]
    %v66 = vld [vmem:[#allocation2 + $0xe8] sm:$0xff]
    %v67 = vld [vmem:[#allocation2 + $0xf0] sm:$0xff]
    %v68 = vld [vmem:[#allocation2 + $0xf8] sm:$0xff]
    %v69 = vld [vmem:[#allocation2 + $0x100] sm:$0xff]
    %v70 = vld [vmem:[#allocation2 + $0x108] sm:$0xff]
    %v71 = vld [vmem:[#allocation2 + $0x110] sm:$0xff]
    %v72 = vld [vmem:[#allocation2 + $0x118] sm:$0xff]
    %v73 = vld [vmem:[#allocation2 + $0x120] sm:$0xff]
    %v74 = vld [vmem:[#allocation2 + $0x128] sm:$0xff]
    %v75 = vld [vmem:[#allocation2 + $0x130] sm:$0xff]
    %v76 = vld [vmem:[#allocation2 + $0x138] sm:$0xff]
    %v77 = vld [vmem:[#allocation2 + $0x140] sm:$0xff]
    %v78 = vld [vmem:[#allocation2 + $0x148] sm:$0xff]
    %v79 = vld [vmem:[#allocation2 + $0x150] sm:$0xff]
    %v80 = vld [vmem:[#allocation2 + $0x158] sm:$0xff]
    %v81 = vld [vmem:[#allocation2 + $0x160] sm:$0xff]
    %v82 = vld [vmem:[#allocation2 + $0x168] sm:$0xff]
    %v83 = vld [vmem:[#allocation2 + $0x170] sm:$0xff]
    %v84 = vld [vmem:[#allocation2 + $0x178] sm:$0xff]
    %v85 = vld [vmem:[#allocation2 + $0x180] sm:$0xff]
    %v86 = vld [vmem:[#allocation2 + $0x188] sm:$0xff]
    %v87 = vld [vmem:[#allocation2 + $0x190] sm:$0xff]
    %v88 = vld [vmem:[#allocation2 + $0x198] sm:$0xff]
    %v89 = vld [vmem:[#allocation2 + $0x1a0] sm:$0xff]
    %v90 = vld [vmem:[#allocation2 + $0x1a8] sm:$0xff]
    %v91 = vld [vmem:[#allocation2 + $0x1b0] sm:$0xff]
    %v92 = vld [vmem:[#allocation2 + $0x1b8] sm:$0xff]
    %v93 = vld [vmem:[#allocation2 + $0x1c0] sm:$0xff]
    %v94 = vld [vmem:[#allocation2 + $0x1c8] sm:$0xff]
    %v95 = vld [vmem:[#allocation2 + $0x1d0] sm:$0xff]
    %v96 = vld [vmem:[#allocation2 + $0x1d8] sm:$0xff]
    %v97 = vld [vmem:[#allocation2 + $0x1e0] sm:$0xff]
    %v98 = vld [vmem:[#allocation2 + $0x1e8] sm:$0xff]
    %v99 = vld [vmem:[#allocation2 + $0x1f0] sm:$0xff]
    %v100 = vld [vmem:[#allocation2 + $0x1f8] sm:$0xff]
    %v101 = vld [vmem:[#allocation2 + $0x200] sm:$0xff]
    %v102 = vld [vmem:[#allocation2 + $0x208] sm:$0xff]
    %v103 = vld [vmem:[#allocation2 + $0x210] sm:$0xff]
    %v104 = vld [vmem:[#allocation2 + $0x218] sm:$0xff]
    %v105 = vld [vmem:[#allocation2 + $0x220] sm:$0xff]
    %v106 = vld [vmem:[#allocation2 + $0x228] sm:$0xff]
    %v107 = vld [vmem:[#allocation2 + $0x230] sm:$0xff]
    %v108 = vld [vmem:[#allocation2 + $0x238] sm:$0xff]
    %v109 = vld [vmem:[#allocation2 + $0x240] sm:$0xff]
    %v110 = vld [vmem:[#allocation2 + $0x248] sm:$0xff]
    %v111 = vld [vmem:[#allocation2 + $0x250] sm:$0xff]
    %v112 = vld [vmem:[#allocation2 + $0x258] sm:$0xff]
    %v113 = vld [vmem:[#allocation2 + $0x260] sm:$0xff]
    %v114 = vld [vmem:[#allocation2 + $0x268] sm:$0xff]
    %v115 = vld [vmem:[#allocation2 + $0x270] sm:$0xff]
    %v116 = vld [vmem:[#allocation2 + $0x278] sm:$0xff]
    %v117 = vld [vmem:[#allocation2 + $0x280] sm:$0xff]
    %v118 = vld [vmem:[#allocation2 + $0x288] sm:$0xff]
    %v119 = vld [vmem:[#allocation2 + $0x290] sm:$0xff]
    %v120 = vld [vmem:[#allocation2 + $0x298] sm:$0xff]
    %v121 = vld [vmem:[#allocation2 + $0x2a0] sm:$0xff]
    %v122 = vld [vmem:[#allocation2 + $0x2a8] sm:$0xff]
    %v123 = vld [vmem:[#allocation2 + $0x2b0] sm:$0xff]
    %v124 = vld [vmem:[#allocation2 + $0x2b8] sm:$0xff]
    %v125 = vld [vmem:[#allocation2 + $0x2c0] sm:$0xff]
    %v126 = vld [vmem:[#allocation2 + $0x2c8] sm:$0xff]
    %v127 = vld [vmem:[#allocation2 + $0x2d0] sm:$0xff]
    %v128 = vld [vmem:[#allocation2 + $0x2d8] sm:$0xff]
    %v129 = vld [vmem:[#allocation2 + $0x2e0] sm:$0xff]
    %v130 = vld [vmem:[#allocation2 + $0x2e8] sm:$0xff]
    %v131 = vld [vmem:[#allocation2 + $0x2f0] sm:$0xff]
    %v132 = vld [vmem:[#allocation2 + $0x2f8] sm:$0xff]
    %v133 = vld [vmem:[#allocation2 + $0x300] sm:$0xff]
    %v134 = vld [vmem:[#allocation2 + $0x308] sm:$0xff]
    %v135 = vld [vmem:[%s2] sm:$0x1]
    %v137 = vlaneseq
    %v138 = vshrl.u32 %v137, 7
    %v139 = vsub.s32 0, %v138
    %v140 = vrot.slane %v135, %v139
    %v144 = vcombine.high %v35, %v35
    %v146 = vunpack.c.l.s4 1983009808
    %v147 = vunpack.c.0.s8 %v146
    %v148 = vlaneseq
    %v149 = vshrl.u32 %v148, 7
    %v150 = vsub.s32 %v147, %v149
    %v151 = vrot.slane %v35, %v150
    %v153 = vunpack.c.l.s4 1983009808
    %v154 = vunpack.c.0.s8 %v153
    %v155 = vlaneseq
    %v156 = vshrl.u32 %v155, 7
    %v157 = vsub.s32 %v154, %v156
    %v158 = vrot.slane %v144, %v157
    %v159 = vcombine.high %v151, %v151
    %v160 = vcombine.high %v158, %v158
    %v161 = vcombine.high %v36, %v36
    %v163 = vunpack.c.l.s4 1983009808
    %v164 = vunpack.c.0.s8 %v163
    %v165 = vlaneseq
    %v166 = vshrl.u32 %v165, 7
    %v167 = vsub.s32 %v164, %v166
    %v168 = vrot.slane %v36, %v167
    %v170 = vunpack.c.l.s4 1983009808
    %v171 = vunpack.c.0.s8 %v170
    %v172 = vlaneseq
    %v173 = vshrl.u32 %v172, 7
    %v174 = vsub.s32 %v171, %v173
    %v175 = vrot.slane %v161, %v174
    %v176 = vcombine.high %v168, %v168
    %vm183 = vcmask 130048
    %v184 = vsel %vm183, %v175, 0
    %186 = vmatprep.subr.mxu0 0.0
    %187 = vmatpush1.msra.mxu0 %v37
    %188 = vmatprep.subr.mxu0 0.0
    %189 = vmatpush1.msra.mxu0 %v38
    %190 = vmatprep.subr.mxu0 0.0
    %191 = vmatpush1.msra.mxu0 %v39
    %192 = vmatprep.subr.mxu0 0.0
    %193 = vmatpush1.msra.mxu0 %v40
    %194 = vmatprep.subr.mxu0 0.0
    %195 = vmatpush1.msra.mxu0 %v41
    %196 = vmatprep.subr.mxu0 0.0
    %197 = vmatpush1.msra.mxu0 %v42
    %198 = vmatprep.subr.mxu0 0.0
    %199 = vmatpush1.msra.mxu0 %v43
    %200 = vmatprep.subr.mxu0 0.0
    %201 = vmatpush1.msra.mxu0 %v44
    %202 = vmatprep.subr.mxu0 0.0
    %203 = vmatpush1.msra.mxu0 %v45
    %204 = vmatprep.subr.mxu0 0.0
    %205 = vmatpush1.msra.mxu0 %v46
    %206 = vmatprep.subr.mxu0 0.0
    %207 = vmatpush1.msra.mxu0 %v47
    %208 = vmatprep.subr.mxu0 0.0
    %209 = vmatpush1.msra.mxu0 %v48
    %210 = vmatprep.subr.mxu0 0.0
    %211 = vmatpush1.msra.mxu0 %v49
    %212 = vmatprep.subr.mxu0 0.0
    %213 = vmatpush1.msra.mxu0 %v50
    %214 = vmatprep.subr.mxu0 0.0
    %215 = vmatpush1.msra.mxu0 %v51
    %216 = vmatprep.subr.mxu0 0.0
    %217 = vmatpush1.msra.mxu0 %v52
    %218 = vmatprep.subr.mxu0 0.0
    %219 = vmatpush1.msra.mxu0 %v53
    %220 = vmatprep.subr.mxu0 0.0
    %221 = vmatpush1.msra.mxu0 %v54
    %222 = vmatprep.subr.mxu0 0.0
    %223 = vmatpush1.msra.mxu0 %v55
    %224 = vmatprep.subr.mxu0 0.0
    %225 = vmatpush1.msra.mxu0 %v56
    %226 = vmatprep.subr.mxu0 0.0
    %227 = vmatpush1.msra.mxu0 %v57
    %228 = vmatprep.subr.mxu0 0.0
    %229 = vmatpush1.msra.mxu0 %v58
    %230 = vmatprep.subr.mxu0 0.0
    %231 = vmatpush1.msra.mxu0 %v59
    %232 = vmatprep.subr.mxu0 0.0
    %233 = vmatpush1.msra.mxu0 %v60
    %234 = vmatprep.subr.mxu0 0.0
    %235 = vmatpush1.msra.mxu0 %v61
    %236 = vmatprep.subr.mxu0 0.0
    %237 = vmatpush1.msra.mxu0 %v62
    %238 = vmatprep.subr.mxu0 0.0
    %239 = vmatpush1.msra.mxu0 %v63
    %240 = vmatprep.subr.mxu0 0.0
    %241 = vmatpush1.msra.mxu0 %v64
    %242 = vmatprep.subr.mxu0 0.0
    %243 = vmatpush1.msra.mxu0 %v65
    %244 = vmatprep.subr.mxu0 0.0
    %245 = vmatpush1.msra.mxu0 %v66
    %246 = vmatprep.subr.mxu0 0.0
    %247 = vmatpush1.msra.mxu0 %v67
    %248 = vmatprep.subr.mxu0 0.0
    %249 = vmatpush1.msra.mxu0 %v68
    %250 = vmatprep.mubr.f32.mxu0 %v159
    %251 = vmatmul.mubr.f32.gmra.mrb[0].mxu0 %v151
    %v252 = vpop.f32.mrb[0].mxu0
    %v253 = vadd.f32 %v140, %v252
    %v254 = vpop.f32.mrb[0].mxu0
    %255 = vdwg.mxu0
    %256 = vmatprep.subr.mxu0 0.0
    %257 = vmatpush1.msra.mxu0 %v69
    %258 = vmatprep.subr.mxu0 0.0
    %259 = vmatpush1.msra.mxu0 %v70
    %260 = vmatprep.subr.mxu0 0.0
    %261 = vmatpush1.msra.mxu0 %v71
    %262 = vmatprep.subr.mxu0 0.0
    %263 = vmatpush1.msra.mxu0 %v72
    %264 = vmatprep.subr.mxu0 0.0
    %265 = vmatpush1.msra.mxu0 %v73
    %266 = vmatprep.subr.mxu0 0.0
    %267 = vmatpush1.msra.mxu0 %v74
    %268 = vmatprep.subr.mxu0 0.0
    %269 = vmatpush1.msra.mxu0 %v75
    %270 = vmatprep.subr.mxu0 0.0
    %271 = vmatpush1.msra.mxu0 %v76
    %272 = vmatprep.subr.mxu0 0.0
    %273 = vmatpush1.msra.mxu0 %v77
    %274 = vmatprep.subr.mxu0 0.0
    %275 = vmatpush1.msra.mxu0 %v78
    %276 = vmatprep.subr.mxu0 0.0
    %277 = vmatpush1.msra.mxu0 %v79
    %278 = vmatprep.subr.mxu0 0.0
    %279 = vmatpush1.msra.mxu0 %v80
    %280 = vmatprep.subr.mxu0 0.0
    %281 = vmatpush1.msra.mxu0 %v81
    %282 = vmatprep.subr.mxu0 0.0
    %283 = vmatpush1.msra.mxu0 %v82
    %284 = vmatprep.subr.mxu0 0.0
    %285 = vmatpush1.msra.mxu0 %v83
    %286 = vmatprep.subr.mxu0 0.0
    %287 = vmatpush1.msra.mxu0 %v84
    %288 = vmatprep.subr.mxu0 0.0
    %289 = vmatpush1.msra.mxu0 %v85
    %290 = vmatprep.subr.mxu0 0.0
    %291 = vmatpush1.msra.mxu0 %v86
    %292 = vmatprep.subr.mxu0 0.0
    %293 = vmatpush1.msra.mxu0 %v87
    %294 = vmatprep.subr.mxu0 0.0
    %295 = vmatpush1.msra.mxu0 %v88
    %296 = vmatprep.subr.mxu0 0.0
    %297 = vmatpush1.msra.mxu0 %v89
    %298 = vmatprep.subr.mxu0 0.0
    %299 = vmatpush1.msra.mxu0 %v90
    %300 = vmatprep.subr.mxu0 0.0
    %301 = vmatpush1.msra.mxu0 %v91
    %302 = vmatprep.subr.mxu0 0.0
    %303 = vmatpush1.msra.mxu0 %v92
    %304 = vmatprep.subr.mxu0 0.0
    %305 = vmatpush1.msra.mxu0 %v93
    %306 = vmatprep.subr.mxu0 0.0
    %307 = vmatpush1.msra.mxu0 %v94
    %308 = vmatprep.subr.mxu0 0.0
    %309 = vmatpush1.msra.mxu0 %v95
    %310 = vmatprep.subr.mxu0 0.0
    %311 = vmatpush1.msra.mxu0 %v96
    %312 = vmatprep.subr.mxu0 0.0
    %313 = vmatpush1.msra.mxu0 %v97
    %314 = vmatprep.subr.mxu0 0.0
    %315 = vmatpush1.msra.mxu0 %v98
    %316 = vmatprep.subr.mxu0 0.0
    %317 = vmatpush1.msra.mxu0 %v99
    %318 = vmatprep.subr.mxu0 0.0
    %319 = vmatpush1.msra.mxu0 %v100
    %320 = vmatprep.mubr.f32.mxu0 %v160
    %321 = vmatmul.mubr.f32.gmra.mrb[0].mxu0 %v158
    %v322 = vpop.f32.mrb[0].mxu0
    %v323 = vadd.f32 %v253, %v322
    %v324 = vpop.f32.mrb[0].mxu0
    %325 = vdwg.mxu0
    %326 = vmatprep.subr.mxu0 0.0
    %327 = vmatpush1.msra.mxu0 %v101
    %328 = vmatprep.subr.mxu0 0.0
    %329 = vmatpush1.msra.mxu0 %v102
    %330 = vmatprep.subr.mxu0 0.0
    %331 = vmatpush1.msra.mxu0 %v103
    %332 = vmatprep.subr.mxu0 0.0
    %333 = vmatpush1.msra.mxu0 %v104
    %334 = vmatprep.subr.mxu0 0.0
    %335 = vmatpush1.msra.mxu0 %v105
    %336 = vmatprep.subr.mxu0 0.0
    %337 = vmatpush1.msra.mxu0 %v106
    %338 = vmatprep.subr.mxu0 0.0
    %339 = vmatpush1.msra.mxu0 %v107
    %340 = vmatprep.subr.mxu0 0.0
    %341 = vmatpush1.msra.mxu0 %v108
    %342 = vmatprep.subr.mxu0 0.0
    %343 = vmatpush1.msra.mxu0 %v109
    %344 = vmatprep.subr.mxu0 0.0
    %345 = vmatpush1.msra.mxu0 %v110
    %346 = vmatprep.subr.mxu0 0.0
    %347 = vmatpush1.msra.mxu0 %v111
    %348 = vmatprep.subr.mxu0 0.0
    %349 = vmatpush1.msra.mxu0 %v112
    %350 = vmatprep.subr.mxu0 0.0
    %351 = vmatpush1.msra.mxu0 %v113
    %352 = vmatprep.subr.mxu0 0.0
    %353 = vmatpush1.msra.mxu0 %v114
    %354 = vmatprep.subr.mxu0 0.0
    %355 = vmatpush1.msra.mxu0 %v115
    %356 = vmatprep.subr.mxu0 0.0
    %357 = vmatpush1.msra.mxu0 %v116
    %358 = vmatprep.subr.mxu0 0.0
    %359 = vmatpush1.msra.mxu0 %v117
    %360 = vmatprep.subr.mxu0 0.0
    %361 = vmatpush1.msra.mxu0 %v118
    %362 = vmatprep.subr.mxu0 0.0
    %363 = vmatpush1.msra.mxu0 %v119
    %364 = vmatprep.subr.mxu0 0.0
    %365 = vmatpush1.msra.mxu0 %v120
    %366 = vmatprep.subr.mxu0 0.0
    %367 = vmatpush1.msra.mxu0 %v121
    %368 = vmatprep.subr.mxu0 0.0
    %369 = vmatpush1.msra.mxu0 %v122
    %370 = vmatprep.subr.mxu0 0.0
    %371 = vmatpush1.msra.mxu0 %v123
    %372 = vmatprep.subr.mxu0 0.0
    %373 = vmatpush1.msra.mxu0 %v124
    %374 = vmatprep.subr.mxu0 0.0
    %375 = vmatpush1.msra.mxu0 %v125
    %376 = vmatprep.subr.mxu0 0.0
    %377 = vmatpush1.msra.mxu0 %v126
    %378 = vmatprep.subr.mxu0 0.0
    %379 = vmatpush1.msra.mxu0 %v127
    %380 = vmatprep.subr.mxu0 0.0
    %381 = vmatpush1.msra.mxu0 %v128
    %382 = vmatprep.subr.mxu0 0.0
    %383 = vmatpush1.msra.mxu0 %v129
    %384 = vmatprep.subr.mxu0 0.0
    %385 = vmatpush1.msra.mxu0 %v130
    %386 = vmatprep.subr.mxu0 0.0
    %387 = vmatpush1.msra.mxu0 %v131
    %388 = vmatprep.subr.mxu0 0.0
    %389 = vmatpush1.msra.mxu0 %v132
    %390 = vmatprep.mubr.f32.mxu0 %v176
    %391 = vmatmul.mubr.f32.gmra.mrb[0].mxu0 %v168
    %v392 = vpop.f32.mrb[0].mxu0
    %v393 = vadd.f32 %v323, %v392
    %v394 = vpop.f32.mrb[0].mxu0
    %395 = vdwg.mxu0
    %396 = vmatprep.subr.mxu0 0.0
    %397 = vmatpush1.msra.mxu0 %v133
    %398 = vmatprep.subr.mxu0 0.0
    %399 = vmatpush1.msra.mxu0 %v134
    %400 = vmatprep.subr.mxu0 0.0
    %401 = vmatpush1.msra.mxu0 0.0
    %402 = vmatprep.subr.mxu0 0.0
    %403 = vmatpush1.msra.mxu0 0.0
    %404 = vmatprep.subr.mxu0 0.0
    %405 = vmatpush1.msra.mxu0 0.0
    %406 = vmatprep.subr.mxu0 0.0
    %407 = vmatpush1.msra.mxu0 0.0
    %408 = vmatprep.subr.mxu0 0.0
    %409 = vmatpush1.msra.mxu0 0.0
    %410 = vmatprep.subr.mxu0 0.0
    %411 = vmatpush1.msra.mxu0 0.0
    %412 = vmatprep.subr.mxu0 0.0
    %413 = vmatpush1.msra.mxu0 0.0
    %414 = vmatprep.subr.mxu0 0.0
    %415 = vmatpush1.msra.mxu0 0.0
    %416 = vmatprep.subr.mxu0 0.0
    %417 = vmatpush1.msra.mxu0 0.0
    %418 = vmatprep.subr.mxu0 0.0
    %419 = vmatpush1.msra.mxu0 0.0
    %420 = vmatprep.subr.mxu0 0.0
    %421 = vmatpush1.msra.mxu0 0.0
    %422 = vmatprep.subr.mxu0 0.0
    %423 = vmatpush1.msra.mxu0 0.0
    %424 = vmatprep.subr.mxu0 0.0
    %425 = vmatpush1.msra.mxu0 0.0
    %426 = vmatprep.subr.mxu0 0.0
    %427 = vmatpush1.msra.mxu0 0.0
    %428 = vmatprep.subr.mxu0 0.0
    %429 = vmatpush1.msra.mxu0 0.0
    %430 = vmatprep.subr.mxu0 0.0
    %431 = vmatpush1.msra.mxu0 0.0
    %432 = vmatprep.subr.mxu0 0.0
    %433 = vmatpush1.msra.mxu0 0.0
    %434 = vmatprep.subr.mxu0 0.0
    %435 = vmatpush1.msra.mxu0 0.0
    %436 = vmatprep.subr.mxu0 0.0
    %437 = vmatpush1.msra.mxu0 0.0
    %438 = vmatprep.subr.mxu0 0.0
    %439 = vmatpush1.msra.mxu0 0.0
    %440 = vmatprep.subr.mxu0 0.0
    %441 = vmatpush1.msra.mxu0 0.0
    %442 = vmatprep.subr.mxu0 0.0
    %443 = vmatpush1.msra.mxu0 0.0
    %444 = vmatprep.subr.mxu0 0.0
    %445 = vmatpush1.msra.mxu0 0.0
    %446 = vmatprep.subr.mxu0 0.0
    %447 = vmatpush1.msra.mxu0 0.0
    %448 = vmatprep.subr.mxu0 0.0
    %449 = vmatpush1.msra.mxu0 0.0
    %450 = vmatprep.subr.mxu0 0.0
    %451 = vmatpush1.msra.mxu0 0.0
    %452 = vmatprep.subr.mxu0 0.0
    %453 = vmatpush1.msra.mxu0 0.0
    %454 = vmatprep.subr.mxu0 0.0
    %455 = vmatpush1.msra.mxu0 0.0
    %456 = vmatprep.subr.mxu0 0.0
    %457 = vmatpush1.msra.mxu0 0.0
    %458 = vmatprep.subr.mxu0 0.0
    %459 = vmatpush1.msra.mxu0 0.0
    %460 = vmatprep.mubr.f32.mxu0 0.0
    %461 = vmatmul.mubr.f32.gmra.mrb[0].mxu0 %v184
    %v462 = vpop.f32.mrb[0].mxu0
    %v463 = vadd.f32 %v393, %v462
    %v464 = vpop.f32.mrb[0].mxu0
    %465 = vdwg.mxu0
    %v466 = vmax.f32 %v463, 0.0
    %v467 = vld [vmem:[%s3] sm:$0xff]
    %v468 = vld [vmem:[%s3 + $0x8] sm:$0xff]
    %v469 = vld [vmem:[%s3 + $0x10] sm:$0xff]
    %v470 = vld [vmem:[%s3 + $0x18] sm:$0xff]
    %v471 = vld [vmem:[%s3 + $0x20] sm:$0xff]
    %v472 = vld [vmem:[%s3 + $0x28] sm:$0xff]
    %v473 = vld [vmem:[%s3 + $0x30] sm:$0xff]
    %v474 = vld [vmem:[%s3 + $0x38] sm:$0xff]
    %v475 = vld [vmem:[%s3 + $0x40] sm:$0xff]
    %v476 = vld [vmem:[%s3 + $0x48] sm:$0xff]
    %v477 = vld [vmem:[%s3 + $0x50] sm:$0xff]
    %v478 = vld [vmem:[%s3 + $0x58] sm:$0xff]
    %v479 = vld [vmem:[%s3 + $0x60] sm:$0xff]
    %v480 = vld [vmem:[%s3 + $0x68] sm:$0xff]
    %v481 = vld [vmem:[%s3 + $0x70] sm:$0xff]
    %v482 = vld [vmem:[%s3 + $0x78] sm:$0xff]
    %v483 = vld [vmem:[%s4] sm:$0x1]
    %v485 = vlaneseq
    %v486 = vshrl.u32 %v485, 7
    %v487 = vsub.s32 0, %v486
    %v488 = vrot.slane %v483, %v487
    %490 = vmatprep.subr.mxu0 0.0
    %491 = vmatpush1.msra.mxu0 %v467
    %492 = vmatprep.subr.mxu0 0.0
    %493 = vmatpush1.msra.mxu0 %v468
    %494 = vmatprep.subr.mxu0 0.0
    %495 = vmatpush1.msra.mxu0 %v469
    %496 = vmatprep.subr.mxu0 0.0
    %497 = vmatpush1.msra.mxu0 %v470
    %498 = vmatprep.subr.mxu0 0.0
    %499 = vmatpush1.msra.mxu0 %v471
    %500 = vmatprep.subr.mxu0 0.0
    %501 = vmatpush1.msra.mxu0 %v472
    %502 = vmatprep.subr.mxu0 0.0
    %503 = vmatpush1.msra.mxu0 %v473
    %504 = vmatprep.subr.mxu0 0.0
    %505 = vmatpush1.msra.mxu0 %v474
    %506 = vmatprep.subr.mxu0 0.0
    %507 = vmatpush1.msra.mxu0 %v475
    %508 = vmatprep.subr.mxu0 0.0
    %509 = vmatpush1.msra.mxu0 %v476
    %510 = vmatprep.subr.mxu0 0.0
    %511 = vmatpush1.msra.mxu0 %v477
    %512 = vmatprep.subr.mxu0 0.0
    %513 = vmatpush1.msra.mxu0 %v478
    %514 = vmatprep.subr.mxu0 0.0
    %515 = vmatpush1.msra.mxu0 %v479
    %516 = vmatprep.subr.mxu0 0.0
    %517 = vmatpush1.msra.mxu0 %v480
    %518 = vmatprep.subr.mxu0 0.0
    %519 = vmatpush1.msra.mxu0 %v481
    %520 = vmatprep.subr.mxu0 0.0
    %521 = vmatpush1.msra.mxu0 %v482
    %522 = vmatprep.subr.mxu0 0.0
    %523 = vmatpush1.msra.mxu0 0.0
    %524 = vmatprep.subr.mxu0 0.0
    %525 = vmatpush1.msra.mxu0 0.0
    %526 = vmatprep.subr.mxu0 0.0
    %527 = vmatpush1.msra.mxu0 0.0
    %528 = vmatprep.subr.mxu0 0.0
    %529 = vmatpush1.msra.mxu0 0.0
    %530 = vmatprep.subr.mxu0 0.0
    %531 = vmatpush1.msra.mxu0 0.0
    %532 = vmatprep.subr.mxu0 0.0
    %533 = vmatpush1.msra.mxu0 0.0
    %534 = vmatprep.subr.mxu0 0.0
    %535 = vmatpush1.msra.mxu0 0.0
    %536 = vmatprep.subr.mxu0 0.0
    %537 = vmatpush1.msra.mxu0 0.0
    %538 = vmatprep.subr.mxu0 0.0
    %539 = vmatpush1.msra.mxu0 0.0
    %540 = vmatprep.subr.mxu0 0.0
    %541 = vmatpush1.msra.mxu0 0.0
    %542 = vmatprep.subr.mxu0 0.0
    %543 = vmatpush1.msra.mxu0 0.0
    %544 = vmatprep.subr.mxu0 0.0
    %545 = vmatpush1.msra.mxu0 0.0
    %546 = vmatprep.subr.mxu0 0.0
    %547 = vmatpush1.msra.mxu0 0.0
    %548 = vmatprep.subr.mxu0 0.0
    %549 = vmatpush1.msra.mxu0 0.0
    %550 = vmatprep.subr.mxu0 0.0
    %551 = vmatpush1.msra.mxu0 0.0
    %552 = vmatprep.subr.mxu0 0.0
    %553 = vmatpush1.msra.mxu0 0.0
    %554 = vmatprep.mubr.f32.mxu0 0.0
    %555 = vmatmul.mubr.f32.gmra.mrb[0].mxu0 %v466
    %v556 = vpop.f32.mrb[0].mxu0
    %v557 = vadd.f32 %v488, %v556
    %v558 = vpop.f32.mrb[0].mxu0
    %559 = vdwg.mxu0
    %560 = vst [vmem:[#allocation5] sm:$0x3] %v557
    // Predicated region
    $region26: #{simple_nn_forward.1} parent=1 // pred_check
      _
    $region27: #{simple_nn_forward.1} parent=1 // pred_check_branch
      %562 = sbr.rel (0) target = $region29
    $region28: #{simple_nn_forward.1} parent=1 // pred_region
      %s564 = ssub.s32 32, 32
      %565 = vsyncadd [#allocation4], %s564
      %s567 = sshll.u32 [#allocation5], 4
      %s568 = int_to_ptr.vmem [resolvable:$true] %s567
      %570 = dma.vmem_to_hbm [thread:$0]  %s568, 32, %s5, [#allocation4]
    $region29: #{simple_nn_forward.1} parent=1 // pred_fallthru
      _
    // Predicated region
    $region30: #{simple_nn_forward.1} parent=1 // pred_check
      _
    $region31: #{simple_nn_forward.1} parent=1 // pred_check_branch
      %572 = sbr.rel (0) target = $region33
    $region32: #{simple_nn_forward.1} parent=1 // pred_region
      %573 = dma.done [#allocation4], 32
    $region33: #{simple_nn_forward.1} parent=1 // pred_fallthru
      _
    %574 = vsyncpa [#allocation3], 1
    %575 = vsyncpa [#allocation4], 1

</llo_original>
